<compile_context>
chip_gen: v6e
topology: v6e:2x2x1
jax: 0.10.0
libtpu: 0.0.40
codegen_flags: <defaults>
</compile_context>

<pallas_src>
import functools

import jax
import jax.numpy as jnp
from jax.experimental import pallas as pl
from jax.experimental.pallas import tpu as pltpu


H1, H2 = 400, 300  # logical hidden sizes of the PyTorch module


def _round_up(n, m):
    return ((n + m - 1) // m) * m


H1P, H2P = _round_up(H1, 128), _round_up(H2, 128)  # 512, 384 (lane-padded)


def _actor_kernel(x_ref, w1_ref, w2_ref, w3_ref, b_ref, o_ref,
                  *, min_action, gap_action):
    # Layer 1: Linear + ReLU   (bf16 MXU matmul, f32 accumulation)
    x = x_ref[...].astype(jnp.bfloat16)
    h1 = jnp.dot(x, w1_ref[...], preferred_element_type=jnp.float32)
    h1 = jnp.maximum(h1 + b_ref[:, :H1P], 0.0)

    # Layer 2: Linear + ReLU
    h2 = jnp.dot(h1.astype(jnp.bfloat16), w2_ref[...],
                 preferred_element_type=jnp.float32)
    h2 = jnp.maximum(h2 + b_ref[:, H1P:H1P + H2P], 0.0)

    # Layer 3: Linear + exact sigmoid, then affine range map
    z = jnp.dot(h2.astype(jnp.bfloat16), w3_ref[...],
                preferred_element_type=jnp.float32)
    z = z + b_ref[:, H1P + H2P:]
    sig = 1.0 / (1.0 + jnp.exp(-z))          # exact: EUP has plenty of slack
    o_ref[...] = min_action + gap_action * sig


def _choose_batch_tiling(B, block_batch):
    """Balanced, sublane-aligned batch tiles; >=2 (even) steps for large B."""
    n_steps = max(1, -(-B // block_batch))     # ceil(B / block_batch)
    if B > 16 and n_steps < 2:
        n_steps = 2                            # feed both v7x TensorCores
    if n_steps > 1 and n_steps % 2:
        n_steps += 1                           # even step count for megacore
    tb = _round_up(-(-B // n_steps), 8)        # balanced tile, sublane-aligned
    b_pad = _round_up(B, tb)
    return tb, b_pad


def _vmem_estimate_bytes(tb, state_dim, ap):
    stream = 2 * (tb * state_dim * 4 + tb * ap * 4)              # x/out, double-buffered
    weights = 2 * 2 * (state_dim * H1P + H1P * H2P + H2P * ap)   # bf16, 2 bufs
    bias = 2 * 4 * (H1P + H2P + ap)
    temps = tb * (H1P + H2P + ap) * 4                            # f32 h1/h2/z live values
    return stream + weights + bias + temps


def actor_forward(x, w1, w2, w3, b_packed, *, action_dim, min_action,
                  gap_action, block_batch=1024):
    """x: (B, state_dim) f32.
    w1/w2/w3: bf16, already transposed to (in, out) and zero-padded to
    (state_dim, H1P), (H1P, H2P), (H2P, AP) with AP = round_up(action_dim, 128).
    b_packed: (1, H1P + H2P + AP) f32 (b1 | b2 | b3, zero-padded).
    min_action / gap_action: Python scalars (compile-time constants)."""
    # TODO(synk): per-dimension action bounds would need a (1, AP) operand
    # instead of baked scalars; the trainddpg script only uses scalar bounds.
    B, state_dim = x.shape
    ap = b_packed.shape[1] - H1P - H2P  # padded action dim (multiple of 128)

    tb, b_pad = _choose_batch_tiling(B, block_batch)
    if b_pad != B:
        x = jnp.pad(x, ((0, b_pad - B), (0, 0)))
    grid = (b_pad // tb,)

    kernel = functools.partial(_actor_kernel,
                               min_action=float(min_action),
                               gap_action=float(gap_action))

    compiler_kwargs = dict(dimension_semantics=("parallel",))
    est = _vmem_estimate_bytes(tb, state_dim, ap)
    if est > 12 * 1024 * 1024:  # keep v5e (16 MiB scoped default) safe at big tb
        compiler_kwargs["vmem_limit_bytes"] = min(int(est * 1.5), 56 * 1024 * 1024)

    out = pl.pallas_call(
        kernel,
        out_shape=jax.ShapeDtypeStruct((b_pad, ap), jnp.float32),
        grid=grid,
        in_specs=[
            pl.BlockSpec((tb, state_dim), lambda i: (i, 0)),        # x: batch-tiled
            pl.BlockSpec((state_dim, H1P), lambda i: (0, 0)),       # weights stay
            pl.BlockSpec((H1P, H2P), lambda i: (0, 0)),             # VMEM-resident
            pl.BlockSpec((H2P, ap), lambda i: (0, 0)),              # across grid
            pl.BlockSpec((1, H1P + H2P + ap), lambda i: (0, 0)),    # packed biases
        ],
        out_specs=pl.BlockSpec((tb, ap), lambda i: (i, 0)),
        compiler_params=pltpu.CompilerParams(**compiler_kwargs),
    )(x, w1, w2, w3, b_packed)

    return out[:B, :action_dim]


def init_params(key, state_dim, action_dim):
    """PyTorch nn.Linear default init (uniform +/- 1/sqrt(fan_in)).
    Weights stored as (in, out), zero-padded to lane multiples of 128 and cast
    to bf16; biases kept in f32, zero-padded, packed into one lane-dense row."""
    ap = _round_up(action_dim, 128)
    ks = jax.random.split(key, 6)

    def lin(kw, kb, fan_in, fan_out, in_pad, out_pad):
        bound = 1.0 / jnp.sqrt(fan_in)
        w = jax.random.uniform(kw, (fan_in, fan_out), jnp.float32, -bound, bound)
        b = jax.random.uniform(kb, (fan_out,), jnp.float32, -bound, bound)
        w = jnp.pad(w, ((0, in_pad - fan_in), (0, out_pad - fan_out)))
        b = jnp.pad(b, (0, out_pad - fan_out))
        return w.astype(jnp.bfloat16), b

    w1, b1 = lin(ks[0], ks[1], state_dim, H1, state_dim, H1P)
    w2, b2 = lin(ks[2], ks[3], H1, H2, H1P, H2P)
    w3, b3 = lin(ks[4], ks[5], H2, action_dim, H2P, ap)
    b_packed = jnp.concatenate([b1, b2, b3])[None, :]
    return w1, w2, w3, b_packed


if __name__ == "__main__":
    key = jax.random.PRNGKey(0)
    k_in, k_par = jax.random.split(key)

    batch, state_dim, action_dim = 8, 32, 8
    max_action = 1.0
    min_action, gap_action = -max_action, 2.0 * max_action

    x = jax.random.normal(k_in, (batch, state_dim), jnp.float32)
    w1, w2, w3, b_packed = init_params(k_par, state_dim, action_dim)

    out = actor_forward(x, w1, w2, w3, b_packed, action_dim=action_dim,
                        min_action=min_action, gap_action=gap_action)
    out = jax.block_until_ready(out)

    # Matched-precision reference (same bf16 weights / casts, exact sigmoid).
    b1 = b_packed[:, :H1P]
    b2 = b_packed[:, H1P:H1P + H2P]
    b3 = b_packed[:, H1P + H2P:]
    h1 = jnp.maximum(jnp.dot(x.astype(jnp.bfloat16), w1,
                             preferred_element_type=jnp.float32) + b1, 0.0)
    h2 = jnp.maximum(jnp.dot(h1.astype(jnp.bfloat16), w2,
                             preferred_element_type=jnp.float32) + b2, 0.0)
    z = jnp.dot(h2.astype(jnp.bfloat16), w3,
                preferred_element_type=jnp.float32) + b3
    ref = (min_action + gap_action * jax.nn.sigmoid(z))[:batch, :action_dim]

    assert out.shape == (batch, action_dim)
    assert jnp.allclose(out, ref, atol=1e-3, rtol=1e-3), (
        float(jnp.max(jnp.abs(out - ref))))

    print("KERNEL_OK")
</pallas_src>

<mosaic_0001>
module attributes {stable_mosaic.version = 11 : i64} {
  func.func @_actor_kernel(%arg0: i32, %arg1: memref<8x32xf32, #tpu.memory_space<vmem>>, %arg2: memref<32x512xbf16, #tpu.memory_space<vmem>>, %arg3: memref<512x384xbf16, #tpu.memory_space<vmem>>, %arg4: memref<384x128xbf16, #tpu.memory_space<vmem>>, %arg5: memref<1x1024xf32, #tpu.memory_space<vmem>>, %arg6: memref<8x128xf32, #tpu.memory_space<vmem>>) attributes {dimension_semantics = [#tpu.dimension_semantics<parallel>], iteration_bounds = array<i64: 1>, scalar_prefetch = 0 : i64, scratch_operands = 0 : i64, tpu.core_type = #tpu.core_type<tc>, window_params = [{transform_indices = @transform_0, window_bounds = array<i64: 8, 32>}, {pipeline_mode = #tpu.pipeline_mode<synchronous>, transform_indices = @transform_1, window_bounds = array<i64: 32, 512>}, {pipeline_mode = #tpu.pipeline_mode<synchronous>, transform_indices = @transform_2, window_bounds = array<i64: 512, 384>}, {pipeline_mode = #tpu.pipeline_mode<synchronous>, transform_indices = @transform_3, window_bounds = array<i64: 384, 128>}, {pipeline_mode = #tpu.pipeline_mode<synchronous>, transform_indices = @transform_4, window_bounds = array<i64: 1, 1024>}, {transform_indices = @transform_5, window_bounds = array<i64: 8, 128>}]} {
    %c0 = arith.constant 0 : index
    %c0_0 = arith.constant 0 : index
    %0 = vector.load %arg1[%c0, %c0_0] : memref<8x32xf32, #tpu.memory_space<vmem>>, vector<8x32xf32>
    %1 = arith.truncf %0 : vector<8x32xf32> to vector<8x32xbf16>
    %c0_1 = arith.constant 0 : index
    %c0_2 = arith.constant 0 : index
    %2 = vector.load %arg2[%c0_1, %c0_2] : memref<32x512xbf16, #tpu.memory_space<vmem>>, vector<32x512xbf16>
    %cst = arith.constant dense<0.000000e+00> : vector<8x512xf32>
    %3 = tpu.matmul %1, %2, %cst {dimension_numbers = #tpu.dot_dimension_numbers<[1], [0], [0], [1], [0, 0, 1, 1], [], []>} : vector<8x32xbf16>, vector<32x512xbf16>, vector<8x512xf32> -> vector<8x512xf32>
    %c0_3 = arith.constant 0 : index
    %c0_4 = arith.constant 0 : index
    %4 = vector.load %arg5[%c0_3, %c0_4] : memref<1x1024xf32, #tpu.memory_space<vmem>>, vector<1x512xf32>
    %5 = vector.broadcast %4 : vector<1x512xf32> to vector<8x512xf32>
    %6 = arith.addf %3, %5 : vector<8x512xf32>
    %cst_5 = arith.constant 0.000000e+00 : f32
    %7 = vector.broadcast %cst_5 : f32 to vector<8x512xf32>
    %8 = arith.maximumf %6, %7 : vector<8x512xf32>
    %9 = arith.truncf %8 : vector<8x512xf32> to vector<8x512xbf16>
    %c0_6 = arith.constant 0 : index
    %c0_7 = arith.constant 0 : index
    %10 = vector.load %arg3[%c0_6, %c0_7] : memref<512x384xbf16, #tpu.memory_space<vmem>>, vector<512x384xbf16>
    %cst_8 = arith.constant dense<0.000000e+00> : vector<8x384xf32>
    %11 = tpu.matmul %9, %10, %cst_8 {dimension_numbers = #tpu.dot_dimension_numbers<[1], [0], [0], [1], [0, 0, 1, 1], [], []>} : vector<8x512xbf16>, vector<512x384xbf16>, vector<8x384xf32> -> vector<8x384xf32>
    %c0_9 = arith.constant 0 : index
    %c512 = arith.constant 512 : index
    %12 = vector.load %arg5[%c0_9, %c512] : memref<1x1024xf32, #tpu.memory_space<vmem>>, vector<1x384xf32>
    %13 = vector.broadcast %12 : vector<1x384xf32> to vector<8x384xf32>
    %14 = arith.addf %11, %13 : vector<8x384xf32>
    %cst_10 = arith.constant 0.000000e+00 : f32
    %15 = vector.broadcast %cst_10 : f32 to vector<8x384xf32>
    %16 = arith.maximumf %14, %15 : vector<8x384xf32>
    %17 = arith.truncf %16 : vector<8x384xf32> to vector<8x384xbf16>
    %c0_11 = arith.constant 0 : index
    %c0_12 = arith.constant 0 : index
    %18 = vector.load %arg4[%c0_11, %c0_12] : memref<384x128xbf16, #tpu.memory_space<vmem>>, vector<384x128xbf16>
    %cst_13 = arith.constant dense<0.000000e+00> : vector<8x128xf32>
    %19 = tpu.matmul %17, %18, %cst_13 {dimension_numbers = #tpu.dot_dimension_numbers<[1], [0], [0], [1], [0, 0, 1, 1], [], []>} : vector<8x384xbf16>, vector<384x128xbf16>, vector<8x128xf32> -> vector<8x128xf32>
    %c0_14 = arith.constant 0 : index
    %c896 = arith.constant 896 : index
    %20 = vector.load %arg5[%c0_14, %c896] : memref<1x1024xf32, #tpu.memory_space<vmem>>, vector<1x128xf32>
    %21 = vector.broadcast %20 : vector<1x128xf32> to vector<8x128xf32>
    %22 = arith.addf %19, %21 : vector<8x128xf32>
    %cst_15 = arith.constant 0.000000e+00 : f32
    %23 = vector.broadcast %cst_15 : f32 to vector<8x128xf32>
    %24 = arith.subf %23, %22 : vector<8x128xf32>
    %25 = math.exp %24 : vector<8x128xf32>
    %cst_16 = arith.constant 1.000000e+00 : f32
    %26 = vector.broadcast %cst_16 : f32 to vector<8x128xf32>
    %27 = arith.addf %26, %25 : vector<8x128xf32>
    %cst_17 = arith.constant 1.000000e+00 : f32
    %28 = vector.broadcast %cst_17 : f32 to vector<8x128xf32>
    %29 = arith.divf %28, %27 : vector<8x128xf32>
    %cst_18 = arith.constant 2.000000e+00 : f32
    %30 = vector.broadcast %cst_18 : f32 to vector<8x128xf32>
    %31 = arith.mulf %30, %29 : vector<8x128xf32>
    %cst_19 = arith.constant -1.000000e+00 : f32
    %32 = vector.broadcast %cst_19 : f32 to vector<8x128xf32>
    %33 = arith.addf %32, %31 : vector<8x128xf32>
    %c0_20 = arith.constant 0 : index
    %c0_21 = arith.constant 0 : index
    %34 = vector.load %arg6[%c0_20, %c0_21] : memref<8x128xf32, #tpu.memory_space<vmem>>, vector<8x128xf32>
    tpu.vector_store %arg6[%c0_20, %c0_21], %33 {strides = array<i32>} : memref<8x128xf32, #tpu.memory_space<vmem>>, vector<8x128xf32>,
    return
  }
  func.func @transform_0(%arg0: i32) -> (i32, i32) {
    %c0_i32 = arith.constant 0 : i32
    %c0_i32_0 = arith.constant 0 : i32
    return %arg0, %c0_i32 : i32, i32
  }
  func.func @transform_1(%arg0: i32) -> (i32, i32) {
    %c0_i32 = arith.constant 0 : i32
    %c0_i32_0 = arith.constant 0 : i32
    %c0_i32_1 = arith.constant 0 : i32
    return %c0_i32, %c0_i32_0 : i32, i32
  }
  func.func @transform_2(%arg0: i32) -> (i32, i32) {
    %c0_i32 = arith.constant 0 : i32
    %c0_i32_0 = arith.constant 0 : i32
    %c0_i32_1 = arith.constant 0 : i32
    return %c0_i32, %c0_i32_0 : i32, i32
  }
  func.func @transform_3(%arg0: i32) -> (i32, i32) {
    %c0_i32 = arith.constant 0 : i32
    %c0_i32_0 = arith.constant 0 : i32
    %c0_i32_1 = arith.constant 0 : i32
    return %c0_i32, %c0_i32_0 : i32, i32
  }
  func.func @transform_4(%arg0: i32) -> (i32, i32) {
    %c0_i32 = arith.constant 0 : i32
    %c0_i32_0 = arith.constant 0 : i32
    %c0_i32_1 = arith.constant 0 : i32
    return %c0_i32, %c0_i32_0 : i32, i32
  }
  func.func @transform_5(%arg0: i32) -> (i32, i32) {
    %c0_i32 = arith.constant 0 : i32
    %c0_i32_0 = arith.constant 0 : i32
    return %arg0, %c0_i32 : i32, i32
  }
}

</mosaic_0001>

<llo_original>
// kernel: tpu_custom_call.1
$region0: #{tpu_custom_call.1}
  #allocation0 [shape = 'u32[]', space=smem, size = 0x4, offset = 0x4, fixed_abs, tag = 'smem constant byte address 0x4 - core index']
  #allocation1 [shape = 'u32[144,128]{1,0:T(1,128)}', space=vmem, size = 0x12000, scoped, tag = 'internal scratch']
  %s0 = inlined_call_operand.hbm [shape: f32[8,32], index: 0, kind: input, shape index: {}]
  %s1 = inlined_call_operand.hbm [shape: bf16[32,512], index: 1, kind: input, shape index: {}]
  %s2 = inlined_call_operand.hbm [shape: bf16[512,384], index: 2, kind: input, shape index: {}]
  %s3 = inlined_call_operand.hbm [shape: bf16[384,128], index: 3, kind: input, shape index: {}]
  %s4 = inlined_call_operand.hbm [shape: f32[1,1024], index: 4, kind: input, shape index: {}]
  %s5 = inlined_call_operand.hbm [shape: f32[8,128], index: 5, kind: output, shape index: {}]
  %s6 = sld [smem:[#allocation0]]
  $region50: #{tpu_custom_call.1} parent=0
    _
  %s8 = ssub.s32 1, %s6
  %s9 = scalar_select 0, %s8, %s6
  $region1: #{tpu_custom_call.1} parent=0
    #allocation2 [shape = 'u8[4096]{0}', space=vmem, size = 0x1000, scoped, tag = 'input window, operand 0, single buffered']
    #allocation3 [shape = 's32[1]{0}', space=sflag, size = 0x4, scoped, tag = 'scoped memory for tpu_custom_call.1']
    #allocation4 [shape = 's32[1]{0}', space=sflag, size = 0x4, scoped, tag = 'scoped memory for tpu_custom_call.1']
    #allocation5 [shape = 'u8[32768]{0}', space=vmem, size = 0x8000, scoped, tag = 'input window, operand 1, single buffered']
    #allocation6 [shape = 's32[1]{0}', space=sflag, size = 0x4, scoped, tag = 'scoped memory for tpu_custom_call.1']
    #allocation7 [shape = 'u8[393216]{0}', space=vmem, size = 0x60000, scoped, tag = 'input window, operand 2, single buffered']
    #allocation8 [shape = 'u8[98304]{0}', space=vmem, size = 0x18000, scoped, tag = 'input window, operand 3, single buffered']
    #allocation9 [shape = 's32[1]{0}', space=sflag, size = 0x4, scoped, tag = 'scoped memory for tpu_custom_call.1']
    #allocation10 [shape = 'u8[4096]{0}', space=vmem, size = 0x1000, scoped, tag = 'input window, operand 4, single buffered']
    #allocation11 [shape = 'u8[4096]{0}', space=vmem, size = 0x1000, scoped, tag = 'output window, operand 0, single buffered']
    %10 = vsyncpa [#allocation3], 0
    %11 = vsyncpa [#allocation6], 0
    %12 = vsyncpa [#allocation9], 0
    %13 = vsyncpa [#allocation4], 0
    // Predicated region
    $region2: #{tpu_custom_call.1} parent=1 // pred_check
      _
    $region3: #{tpu_custom_call.1} parent=1 // pred_check_branch
      %15 = sbr.rel (0) target = $region5
    $region4: #{tpu_custom_call.1} parent=1 // pred_region
      %s17 = ssub.s32 128, 128
      %18 = vsyncadd [#allocation3], %s17
      %s20 = sshll.u32 [#allocation2], 4
      %s21 = int_to_ptr.vmem [resolvable:$true] %s20
      %23 = dma.hbm_to_vmem [thread:$0]  %s0, 128, %s21, [#allocation3]
    $region5: #{tpu_custom_call.1} parent=1 // pred_fallthru
      _
    // Predicated region
    $region6: #{tpu_custom_call.1} parent=1 // pred_check
      _
    $region7: #{tpu_custom_call.1} parent=1 // pred_check_branch
      %25 = sbr.rel (0) target = $region9
    $region8: #{tpu_custom_call.1} parent=1 // pred_region
      %s27 = ssub.s32 1024, 1024
      %28 = vsyncadd [#allocation6], %s27
      %s29 = sshll.u32 [#allocation5], 4
      %s30 = int_to_ptr.vmem [resolvable:$true] %s29
      %35 = dma.hbm_to_vmem [thread:$0]  %s1, 1024, %s30, [#allocation6], 256, 256, 16
    $region9: #{tpu_custom_call.1} parent=1 // pred_fallthru
      _
    // Predicated region
    $region10: #{tpu_custom_call.1} parent=1 // pred_check
      _
    $region11: #{tpu_custom_call.1} parent=1 // pred_check_branch
      %37 = sbr.rel (0) target = $region13
    $region12: #{tpu_custom_call.1} parent=1 // pred_region
      %s39 = ssub.s32 12288, 12288
      %40 = vsyncadd [#allocation6], %s39
      %s41 = sshll.u32 [#allocation7], 4
      %s42 = int_to_ptr.vmem [resolvable:$true] %s41
      %47 = dma.hbm_to_vmem [thread:$0]  %s2, 12288, %s42, [#allocation6], 192, 192, 12
    $region13: #{tpu_custom_call.1} parent=1 // pred_fallthru
      _
    // Predicated region
    $region14: #{tpu_custom_call.1} parent=1 // pred_check
      _
    $region15: #{tpu_custom_call.1} parent=1 // pred_check_branch
      %49 = sbr.rel (0) target = $region17
    $region16: #{tpu_custom_call.1} parent=1 // pred_region
      %s51 = ssub.s32 3072, 3072
      %52 = vsyncadd [#allocation9], %s51
      %s53 = sshll.u32 [#allocation8], 4
      %s54 = int_to_ptr.vmem [resolvable:$true] %s53
      %59 = dma.hbm_to_vmem [thread:$0]  %s3, 3072, %s54, [#allocation9], 64, 64, 4
    $region17: #{tpu_custom_call.1} parent=1 // pred_fallthru
      _
    // Predicated region
    $region18: #{tpu_custom_call.1} parent=1 // pred_check
      _
    $region19: #{tpu_custom_call.1} parent=1 // pred_check_branch
      %61 = sbr.rel (0) target = $region21
    $region20: #{tpu_custom_call.1} parent=1 // pred_region
      %s63 = ssub.s32 128, 128
      %64 = vsyncadd [#allocation9], %s63
      %s66 = sshll.u32 [#allocation10], 4
      %s67 = int_to_ptr.vmem [resolvable:$true] %s66
      %69 = dma.hbm_to_vmem [thread:$0]  %s4, 128, %s67, [#allocation9]
    $region21: #{tpu_custom_call.1} parent=1 // pred_fallthru
      _
    // Predicated region
    $region22: #{tpu_custom_call.1} parent=1 // pred_check
      _
    $region23: #{tpu_custom_call.1} parent=1 // pred_check_branch
      %71 = sbr.rel (0) target = $region25
    $region24: #{tpu_custom_call.1} parent=1 // pred_region
      %72 = dma.done [#allocation3], 128
    $region25: #{tpu_custom_call.1} parent=1 // pred_fallthru
      _
    // Predicated region
    $region26: #{tpu_custom_call.1} parent=1 // pred_check
      _
    $region27: #{tpu_custom_call.1} parent=1 // pred_check_branch
      %74 = sbr.rel (0) target = $region29
    $region28: #{tpu_custom_call.1} parent=1 // pred_region
      %75 = dma.done [#allocation6], 1024
    $region29: #{tpu_custom_call.1} parent=1 // pred_fallthru
      _
    // Predicated region
    $region30: #{tpu_custom_call.1} parent=1 // pred_check
      _
    $region31: #{tpu_custom_call.1} parent=1 // pred_check_branch
      %77 = sbr.rel (0) target = $region33
    $region32: #{tpu_custom_call.1} parent=1 // pred_region
      %78 = dma.done [#allocation6], 12288
    $region33: #{tpu_custom_call.1} parent=1 // pred_fallthru
      _
    // Predicated region
    $region34: #{tpu_custom_call.1} parent=1 // pred_check
      _
    $region35: #{tpu_custom_call.1} parent=1 // pred_check_branch
      %80 = sbr.rel (0) target = $region37
    $region36: #{tpu_custom_call.1} parent=1 // pred_region
      %81 = dma.done [#allocation9], 3072
    $region37: #{tpu_custom_call.1} parent=1 // pred_fallthru
      _
    // Predicated region
    $region38: #{tpu_custom_call.1} parent=1 // pred_check
      _
    $region39: #{tpu_custom_call.1} parent=1 // pred_check_branch
      %83 = sbr.rel (0) target = $region41
    $region40: #{tpu_custom_call.1} parent=1 // pred_region
      %84 = dma.done [#allocation9], 128
    $region41: #{tpu_custom_call.1} parent=1 // pred_fallthru
      _
    %v86 = vld [vmem:[#allocation2] sm:$0xff]
    %v87 = vpack.c.bf16 %v86, %v86
    %v88 = vld [vmem:[#allocation5] sm:$0xff]
    %v89 = vld [vmem:[#allocation5 + $0x8] sm:$0xff]
    %v90 = vld [vmem:[#allocation5 + $0x10] sm:$0xff]
    %v91 = vld [vmem:[#allocation5 + $0x18] sm:$0xff]
    %v92 = vld [vmem:[#allocation5 + $0x20] sm:$0xff]
    %v93 = vld [vmem:[#allocation5 + $0x28] sm:$0xff]
    %v94 = vld [vmem:[#allocation5 + $0x30] sm:$0xff]
    %v95 = vld [vmem:[#allocation5 + $0x38] sm:$0xff]
    %v96 = vld [vmem:[#allocation10] sm:$0xf]
    %v98 = vlaneseq
    %v99 = vshrl.u32 %v98, 7
    %v100 = vsub.s32 0, %v99
    %v101 = vrot.slane %v96, %v100
    %v102 = vlaneseq
    %v103 = vshrl.u32 %v102, 7
    %v104 = vsub.s32 1, %v103
    %v105 = vrot.slane %v96, %v104
    %v106 = vlaneseq
    %v107 = vshrl.u32 %v106, 7
    %v108 = vsub.s32 2, %v107
    %v109 = vrot.slane %v96, %v108
    %v110 = vlaneseq
    %v111 = vshrl.u32 %v110, 7
    %v112 = vsub.s32 3, %v111
    %v113 = vrot.slane %v96, %v112
    %v126 = vunpack.c.l.b16 %v88
    %v127 = vunpack.c.h.b16 %v88
    %v128 = vunpack.c.l.b16 %v89
    %v129 = vunpack.c.h.b16 %v89
    %v130 = vunpack.c.l.b16 %v90
    %v131 = vunpack.c.h.b16 %v90
    %v132 = vunpack.c.l.b16 %v91
    %v133 = vunpack.c.h.b16 %v91
    %v134 = vunpack.c.l.b16 %v92
    %v135 = vunpack.c.h.b16 %v92
    %v136 = vunpack.c.l.b16 %v93
    %v137 = vunpack.c.h.b16 %v93
    %v138 = vunpack.c.l.b16 %v94
    %v139 = vunpack.c.h.b16 %v94
    %v140 = vunpack.c.l.b16 %v95
    %v141 = vunpack.c.h.b16 %v95
    %v142 = vpack.c.b16 %v130, %v126
    %v143 = vpack.c.b16 %v131, %v127
    %v144 = vpack.c.b16 %v132, %v128
    %v145 = vpack.c.b16 %v133, %v129
    %v146 = vpack.c.b16 %v138, %v134
    %v147 = vpack.c.b16 %v139, %v135
    %v148 = vpack.c.b16 %v140, %v136
    %v149 = vpack.c.b16 %v141, %v137
    %vm158 = vcmask 261120
    %v160 = vsel %vm158, %v87, 0
    %162 = vmatprep.subr.bf16.mxu0 0
    %163 = vmatpush1.bf16.msra.mxu0 0
    %164 = vmatprep.subr.bf16.mxu0 0
    %165 = vmatpush1.bf16.msra.mxu0 0
    %166 = vmatprep.subr.bf16.mxu0 0
    %167 = vmatpush1.bf16.msra.mxu0 0
    %168 = vmatprep.subr.bf16.mxu0 0
    %169 = vmatpush1.bf16.msra.mxu0 0
    %170 = vmatprep.subr.bf16.mxu0 0
    %171 = vmatpush1.bf16.msra.mxu0 0
    %172 = vmatprep.subr.bf16.mxu0 0
    %173 = vmatpush1.bf16.msra.mxu0 0
    %174 = vmatprep.subr.bf16.mxu0 %v147
    %175 = vmatpush1.bf16.msra.mxu0 %v146
    %176 = vmatprep.subr.bf16.mxu0 %v143
    %177 = vmatpush1.bf16.msra.mxu0 %v142
    %178 = vmatprep.subr.bf16.mxu0 0
    %179 = vmatpush2.bf16.msra.mxu0 0
    %180 = vmatprep.subr.bf16.mxu0 0
    %181 = vmatpush2.bf16.msra.mxu0 0
    %182 = vmatprep.subr.bf16.mxu0 0
    %183 = vmatpush2.bf16.msra.mxu0 0
    %184 = vmatprep.subr.bf16.mxu0 0
    %185 = vmatpush2.bf16.msra.mxu0 0
    %186 = vmatprep.subr.bf16.mxu0 0
    %187 = vmatpush2.bf16.msra.mxu0 0
    %188 = vmatprep.subr.bf16.mxu0 0
    %189 = vmatpush2.bf16.msra.mxu0 0
    %190 = vmatprep.subr.bf16.mxu0 0
    %191 = vmatpush2.bf16.msra.mxu0 0
    %192 = vmatprep.subr.bf16.mxu0 0
    %193 = vmatpush2.bf16.msra.mxu0 0
    %194 = vmatprep.mubr.bf16.mxu0 0
    %195 = vmatmul.mubr.bf16.gmra.mxu0 %v160
    %v196 = vpop.f32.mrf.mxu0
    %v197 = vadd.f32 %v101, %v196
    %v198 = vpop.f32.mrf.mxu0
    %v199 = vadd.f32 %v105, %v198
    %v200 = vpop.f32.mrf.mxu0
    %v201 = vpop.f32.mrf.mxu0
    %202 = vdwg.mxu0
    %203 = vmatprep.subr.bf16.mxu0 0
    %204 = vmatpush1.bf16.msra.mxu0 0
    %205 = vmatprep.subr.bf16.mxu0 0
    %206 = vmatpush1.bf16.msra.mxu0 0
    %207 = vmatprep.subr.bf16.mxu0 0
    %208 = vmatpush1.bf16.msra.mxu0 0
    %209 = vmatprep.subr.bf16.mxu0 0
    %210 = vmatpush1.bf16.msra.mxu0 0
    %211 = vmatprep.subr.bf16.mxu0 0
    %212 = vmatpush1.bf16.msra.mxu0 0
    %213 = vmatprep.subr.bf16.mxu0 0
    %214 = vmatpush1.bf16.msra.mxu0 0
    %215 = vmatprep.subr.bf16.mxu0 %v149
    %216 = vmatpush1.bf16.msra.mxu0 %v148
    %217 = vmatprep.subr.bf16.mxu0 %v145
    %218 = vmatpush1.bf16.msra.mxu0 %v144
    %219 = vmatprep.subr.bf16.mxu0 0
    %220 = vmatpush2.bf16.msra.mxu0 0
    %221 = vmatprep.subr.bf16.mxu0 0
    %222 = vmatpush2.bf16.msra.mxu0 0
    %223 = vmatprep.subr.bf16.mxu0 0
    %224 = vmatpush2.bf16.msra.mxu0 0
    %225 = vmatprep.subr.bf16.mxu0 0
    %226 = vmatpush2.bf16.msra.mxu0 0
    %227 = vmatprep.subr.bf16.mxu0 0
    %228 = vmatpush2.bf16.msra.mxu0 0
    %229 = vmatprep.subr.bf16.mxu0 0
    %230 = vmatpush2.bf16.msra.mxu0 0
    %231 = vmatprep.subr.bf16.mxu0 0
    %232 = vmatpush2.bf16.msra.mxu0 0
    %233 = vmatprep.subr.bf16.mxu0 0
    %234 = vmatpush2.bf16.msra.mxu0 0
    %235 = vmatprep.mubr.bf16.mxu0 0
    %236 = vmatmul.mubr.bf16.gmra.mxu0 %v160
    %v237 = vpop.f32.mrf.mxu0
    %v238 = vadd.f32 %v109, %v237
    %v239 = vpop.f32.mrf.mxu0
    %v240 = vadd.f32 %v113, %v239
    %v241 = vpop.f32.mrf.mxu0
    %v242 = vpop.f32.mrf.mxu0
    %243 = vdwg.mxu0
    %v244 = vmax.f32 %v197, 0.0
    %v245 = vmax.f32 %v199, 0.0
    %v246 = vmax.f32 %v238, 0.0
    %v247 = vmax.f32 %v240, 0.0
    %v248 = vpack.c.bf16 %v244, %v244
    %v249 = vpack.c.bf16 %v245, %v245
    %v250 = vpack.c.bf16 %v246, %v246
    %v251 = vpack.c.bf16 %v247, %v247
    %v252 = vld [vmem:[#allocation7] sm:$0xff]
    %v253 = vld [vmem:[#allocation7 + $0x8] sm:$0xf]
    %v254 = vld [vmem:[#allocation7 + $0xc] sm:$0xff]
    %v255 = vld [vmem:[#allocation7 + $0x14] sm:$0xf]
    %v256 = vld [vmem:[#allocation7 + $0x18] sm:$0xff]
    %v257 = vld [vmem:[#allocation7 + $0x20] sm:$0xf]
    %v258 = vld [vmem:[#allocation7 + $0x24] sm:$0xff]
    %v259 = vld [vmem:[#allocation7 + $0x2c] sm:$0xf]
    %v260 = vld [vmem:[#allocation7 + $0x30] sm:$0xff]
    %v261 = vld [vmem:[#allocation7 + $0x38] sm:$0xf]
    %v262 = vld [vmem:[#allocation7 + $0x3c] sm:$0xff]
    %v263 = vld [vmem:[#allocation7 + $0x44] sm:$0xf]
    %v264 = vld [vmem:[#allocation7 + $0x48] sm:$0xff]
    %v265 = vld [vmem:[#allocation7 + $0x50] sm:$0xf]
    %v266 = vld [vmem:[#allocation7 + $0x54] sm:$0xff]
    %v267 = vld [vmem:[#allocation7 + $0x5c] sm:$0xf]
    %v268 = vld [vmem:[#allocation7 + $0x60] sm:$0xff]
    %v269 = vld [vmem:[#allocation7 + $0x68] sm:$0xf]
    %v270 = vld [vmem:[#allocation7 + $0x6c] sm:$0xff]
    %v271 = vld [vmem:[#allocation7 + $0x74] sm:$0xf]
    %v272 = vld [vmem:[#allocation7 + $0x78] sm:$0xff]
    %v273 = vld [vmem:[#allocation7 + $0x80] sm:$0xf]
    %v274 = vld [vmem:[#allocation7 + $0x84] sm:$0xff]
    %v275 = vld [vmem:[#allocation7 + $0x8c] sm:$0xf]
    %v276 = vld [vmem:[#allocation7 + $0x90] sm:$0xff]
    %v277 = vld [vmem:[#allocation7 + $0x98] sm:$0xf]
    %v278 = vld [vmem:[#allocation7 + $0x9c] sm:$0xff]
    %v279 = vld [vmem:[#allocation7 + $0xa4] sm:$0xf]
    %v280 = vld [vmem:[#allocation7 + $0xa8] sm:$0xff]
    %v281 = vld [vmem:[#allocation7 + $0xb0] sm:$0xf]
    %v282 = vld [vmem:[#allocation7 + $0xb4] sm:$0xff]
    %v283 = vld [vmem:[#allocation7 + $0xbc] sm:$0xf]
    %v284 = vld [vmem:[#allocation7 + $0xc0] sm:$0xff]
    %v285 = vld [vmem:[#allocation7 + $0xc8] sm:$0xf]
    %v286 = vld [vmem:[#allocation7 + $0xcc] sm:$0xff]
    %v287 = vld [vmem:[#allocation7 + $0xd4] sm:$0xf]
    %v288 = vld [vmem:[#allocation7 + $0xd8] sm:$0xff]
    %v289 = vld [vmem:[#allocation7 + $0xe0] sm:$0xf]
    %v290 = vld [vmem:[#allocation7 + $0xe4] sm:$0xff]
    %v291 = vld [vmem:[#allocation7 + $0xec] sm:$0xf]
    %v292 = vld [vmem:[#allocation7 + $0xf0] sm:$0xff]
    %v293 = vld [vmem:[#allocation7 + $0xf8] sm:$0xf]
    %v294 = vld [vmem:[#allocation7 + $0xfc] sm:$0xff]
    %v295 = vld [vmem:[#allocation7 + $0x104] sm:$0xf]
    %v296 = vld [vmem:[#allocation7 + $0x108] sm:$0xff]
    %v297 = vld [vmem:[#allocation7 + $0x110] sm:$0xf]
    %v298 = vld [vmem:[#allocation7 + $0x114] sm:$0xff]
    %v299 = vld [vmem:[#allocation7 + $0x11c] sm:$0xf]
    %v300 = vld [vmem:[#allocation7 + $0x120] sm:$0xff]
    %v301 = vld [vmem:[#allocation7 + $0x128] sm:$0xf]
    %v302 = vld [vmem:[#allocation7 + $0x12c] sm:$0xff]
    %v303 = vld [vmem:[#allocation7 + $0x134] sm:$0xf]
    %v304 = vld [vmem:[#allocation7 + $0x138] sm:$0xff]
    %v305 = vld [vmem:[#allocation7 + $0x140] sm:$0xf]
    %v306 = vld [vmem:[#allocation7 + $0x144] sm:$0xff]
    %v307 = vld [vmem:[#allocation7 + $0x14c] sm:$0xf]
    %v308 = vld [vmem:[#allocation7 + $0x150] sm:$0xff]
    %v309 = vld [vmem:[#allocation7 + $0x158] sm:$0xf]
    %v310 = vld [vmem:[#allocation7 + $0x15c] sm:$0xff]
    %v311 = vld [vmem:[#allocation7 + $0x164] sm:$0xf]
    %v312 = vld [vmem:[#allocation7 + $0x168] sm:$0xff]
    %v313 = vld [vmem:[#allocation7 + $0x170] sm:$0xf]
    %v314 = vld [vmem:[#allocation7 + $0x174] sm:$0xff]
    %v315 = vld [vmem:[#allocation7 + $0x17c] sm:$0xf]
    %v316 = vld [vmem:[#allocation7 + $0x180] sm:$0xff]
    %v317 = vld [vmem:[#allocation7 + $0x188] sm:$0xf]
    %v318 = vld [vmem:[#allocation7 + $0x18c] sm:$0xff]
    %v319 = vld [vmem:[#allocation7 + $0x194] sm:$0xf]
    %v320 = vld [vmem:[#allocation7 + $0x198] sm:$0xff]
    %v321 = vld [vmem:[#allocation7 + $0x1a0] sm:$0xf]
    %v322 = vld [vmem:[#allocation7 + $0x1a4] sm:$0xff]
    %v323 = vld [vmem:[#allocation7 + $0x1ac] sm:$0xf]
    %v324 = vld [vmem:[#allocation7 + $0x1b0] sm:$0xff]
    %v325 = vld [vmem:[#allocation7 + $0x1b8] sm:$0xf]
    %v326 = vld [vmem:[#allocation7 + $0x1bc] sm:$0xff]
    %v327 = vld [vmem:[#allocation7 + $0x1c4] sm:$0xf]
    %v328 = vld [vmem:[#allocation7 + $0x1c8] sm:$0xff]
    %v329 = vld [vmem:[#allocation7 + $0x1d0] sm:$0xf]
    %v330 = vld [vmem:[#allocation7 + $0x1d4] sm:$0xff]
    %v331 = vld [vmem:[#allocation7 + $0x1dc] sm:$0xf]
    %v332 = vld [vmem:[#allocation7 + $0x1e0] sm:$0xff]
    %v333 = vld [vmem:[#allocation7 + $0x1e8] sm:$0xf]
    %v334 = vld [vmem:[#allocation7 + $0x1ec] sm:$0xff]
    %v335 = vld [vmem:[#allocation7 + $0x1f4] sm:$0xf]
    %v336 = vld [vmem:[#allocation7 + $0x1f8] sm:$0xff]
    %v337 = vld [vmem:[#allocation7 + $0x200] sm:$0xf]
    %v338 = vld [vmem:[#allocation7 + $0x204] sm:$0xff]
    %v339 = vld [vmem:[#allocation7 + $0x20c] sm:$0xf]
    %v340 = vld [vmem:[#allocation7 + $0x210] sm:$0xff]
    %v341 = vld [vmem:[#allocation7 + $0x218] sm:$0xf]
    %v342 = vld [vmem:[#allocation7 + $0x21c] sm:$0xff]
    %v343 = vld [vmem:[#allocation7 + $0x224] sm:$0xf]
    %v344 = vld [vmem:[#allocation7 + $0x228] sm:$0xff]
    %v345 = vld [vmem:[#allocation7 + $0x230] sm:$0xf]
    %v346 = vld [vmem:[#allocation7 + $0x234] sm:$0xff]
    %v347 = vld [vmem:[#allocation7 + $0x23c] sm:$0xf]
    %v348 = vld [vmem:[#allocation7 + $0x240] sm:$0xff]
    %v349 = vld [vmem:[#allocation7 + $0x248] sm:$0xf]
    %v350 = vld [vmem:[#allocation7 + $0x24c] sm:$0xff]
    %v351 = vld [vmem:[#allocation7 + $0x254] sm:$0xf]
    %v352 = vld [vmem:[#allocation7 + $0x258] sm:$0xff]
    %v353 = vld [vmem:[#allocation7 + $0x260] sm:$0xf]
    %v354 = vld [vmem:[#allocation7 + $0x264] sm:$0xff]
    %v355 = vld [vmem:[#allocation7 + $0x26c] sm:$0xf]
    %v356 = vld [vmem:[#allocation7 + $0x270] sm:$0xff]
    %v357 = vld [vmem:[#allocation7 + $0x278] sm:$0xf]
    %v358 = vld [vmem:[#allocation7 + $0x27c] sm:$0xff]
    %v359 = vld [vmem:[#allocation7 + $0x284] sm:$0xf]
    %v360 = vld [vmem:[#allocation7 + $0x288] sm:$0xff]
    %v361 = vld [vmem:[#allocation7 + $0x290] sm:$0xf]
    %v362 = vld [vmem:[#allocation7 + $0x294] sm:$0xff]
    %v363 = vld [vmem:[#allocation7 + $0x29c] sm:$0xf]
    %v364 = vld [vmem:[#allocation7 + $0x2a0] sm:$0xff]
    %v365 = vld [vmem:[#allocation7 + $0x2a8] sm:$0xf]
    %v366 = vld [vmem:[#allocation7 + $0x2ac] sm:$0xff]
    %v367 = vld [vmem:[#allocation7 + $0x2b4] sm:$0xf]
    %v368 = vld [vmem:[#allocation7 + $0x2b8] sm:$0xff]
    %v369 = vld [vmem:[#allocation7 + $0x2c0] sm:$0xf]
    %v370 = vld [vmem:[#allocation7 + $0x2c4] sm:$0xff]
    %v371 = vld [vmem:[#allocation7 + $0x2cc] sm:$0xf]
    %v372 = vld [vmem:[#allocation7 + $0x2d0] sm:$0xff]
    %v373 = vld [vmem:[#allocation7 + $0x2d8] sm:$0xf]
    %v374 = vld [vmem:[#allocation7 + $0x2dc] sm:$0xff]
    %v375 = vld [vmem:[#allocation7 + $0x2e4] sm:$0xf]
    %v376 = vld [vmem:[#allocation7 + $0x2e8] sm:$0xff]
    %v377 = vld [vmem:[#allocation7 + $0x2f0] sm:$0xf]
    %v378 = vld [vmem:[#allocation7 + $0x2f4] sm:$0xff]
    %v379 = vld [vmem:[#allocation7 + $0x2fc] sm:$0xf]
    %v380 = vld [vmem:[#allocation10 + $0x4] sm:$0x7]
    %v382 = vlaneseq
    %v383 = vshrl.u32 %v382, 7
    %v384 = vsub.s32 0, %v383
    %v385 = vrot.slane %v380, %v384
    %v386 = vlaneseq
    %v387 = vshrl.u32 %v386, 7
    %v388 = vsub.s32 1, %v387
    %v389 = vrot.slane %v380, %v388
    %v390 = vlaneseq
    %v391 = vshrl.u32 %v390, 7
    %v392 = vsub.s32 2, %v391
    %v393 = vrot.slane %v380, %v392
    %v525 = vunpack.c.l.b16 %v252
    %v526 = vunpack.c.h.b16 %v252
    %v527 = vunpack.c.l.b16 %v253
    %v528 = vunpack.c.l.b16 %v254
    %v529 = vunpack.c.h.b16 %v254
    %v530 = vunpack.c.l.b16 %v255
    %v531 = vunpack.c.l.b16 %v256
    %v532 = vunpack.c.h.b16 %v256
    %v533 = vunpack.c.l.b16 %v257
    %v534 = vunpack.c.l.b16 %v258
    %v535 = vunpack.c.h.b16 %v258
    %v536 = vunpack.c.l.b16 %v259
    %v537 = vunpack.c.l.b16 %v260
    %v538 = vunpack.c.h.b16 %v260
    %v539 = vunpack.c.l.b16 %v261
    %v540 = vunpack.c.l.b16 %v262
    %v541 = vunpack.c.h.b16 %v262
    %v542 = vunpack.c.l.b16 %v263
    %v543 = vunpack.c.l.b16 %v264
    %v544 = vunpack.c.h.b16 %v264
    %v545 = vunpack.c.l.b16 %v265
    %v546 = vunpack.c.l.b16 %v266
    %v547 = vunpack.c.h.b16 %v266
    %v548 = vunpack.c.l.b16 %v267
    %v549 = vunpack.c.l.b16 %v268
    %v550 = vunpack.c.h.b16 %v268
    %v551 = vunpack.c.l.b16 %v269
    %v552 = vunpack.c.l.b16 %v270
    %v553 = vunpack.c.h.b16 %v270
    %v554 = vunpack.c.l.b16 %v271
    %v555 = vunpack.c.l.b16 %v272
    %v556 = vunpack.c.h.b16 %v272
    %v557 = vunpack.c.l.b16 %v273
    %v558 = vunpack.c.l.b16 %v274
    %v559 = vunpack.c.h.b16 %v274
    %v560 = vunpack.c.l.b16 %v275
    %v561 = vunpack.c.l.b16 %v276
    %v562 = vunpack.c.h.b16 %v276
    %v563 = vunpack.c.l.b16 %v277
    %v564 = vunpack.c.l.b16 %v278
    %v565 = vunpack.c.h.b16 %v278
    %v566 = vunpack.c.l.b16 %v279
    %v567 = vunpack.c.l.b16 %v280
    %v568 = vunpack.c.h.b16 %v280
    %v569 = vunpack.c.l.b16 %v281
    %v570 = vunpack.c.l.b16 %v282
    %v571 = vunpack.c.h.b16 %v282
    %v572 = vunpack.c.l.b16 %v283
    %v573 = vunpack.c.l.b16 %v284
    %v574 = vunpack.c.h.b16 %v284
    %v575 = vunpack.c.l.b16 %v285
    %v576 = vunpack.c.l.b16 %v286
    %v577 = vunpack.c.h.b16 %v286
    %v578 = vunpack.c.l.b16 %v287
    %v579 = vunpack.c.l.b16 %v288
    %v580 = vunpack.c.h.b16 %v288
    %v581 = vunpack.c.l.b16 %v289
    %v582 = vunpack.c.l.b16 %v290
    %v583 = vunpack.c.h.b16 %v290
    %v584 = vunpack.c.l.b16 %v291
    %v585 = vunpack.c.l.b16 %v292
    %v586 = vunpack.c.h.b16 %v292
    %v587 = vunpack.c.l.b16 %v293
    %v588 = vunpack.c.l.b16 %v294
    %v589 = vunpack.c.h.b16 %v294
    %v590 = vunpack.c.l.b16 %v295
    %v591 = vunpack.c.l.b16 %v296
    %v592 = vunpack.c.h.b16 %v296
    %v593 = vunpack.c.l.b16 %v297
    %v594 = vunpack.c.l.b16 %v298
    %v595 = vunpack.c.h.b16 %v298
    %v596 = vunpack.c.l.b16 %v299
    %v597 = vunpack.c.l.b16 %v300
    %v598 = vunpack.c.h.b16 %v300
    %v599 = vunpack.c.l.b16 %v301
    %v600 = vunpack.c.l.b16 %v302
    %v601 = vunpack.c.h.b16 %v302
    %v602 = vunpack.c.l.b16 %v303
    %v603 = vunpack.c.l.b16 %v304
    %v604 = vunpack.c.h.b16 %v304
    %v605 = vunpack.c.l.b16 %v305
    %v606 = vunpack.c.l.b16 %v306
    %v607 = vunpack.c.h.b16 %v306
    %v608 = vunpack.c.l.b16 %v307
    %v609 = vunpack.c.l.b16 %v308
    %v610 = vunpack.c.h.b16 %v308
    %v611 = vunpack.c.l.b16 %v309
    %v612 = vunpack.c.l.b16 %v310
    %v613 = vunpack.c.h.b16 %v310
    %v614 = vunpack.c.l.b16 %v311
    %v615 = vunpack.c.l.b16 %v312
    %v616 = vunpack.c.h.b16 %v312
    %v617 = vunpack.c.l.b16 %v313
    %v618 = vunpack.c.l.b16 %v314
    %v619 = vunpack.c.h.b16 %v314
    %v620 = vunpack.c.l.b16 %v315
    %v621 = vunpack.c.l.b16 %v316
    %v622 = vunpack.c.h.b16 %v316
    %v623 = vunpack.c.l.b16 %v317
    %v624 = vunpack.c.l.b16 %v318
    %v625 = vunpack.c.h.b16 %v318
    %v626 = vunpack.c.l.b16 %v319
    %v627 = vunpack.c.l.b16 %v320
    %v628 = vunpack.c.h.b16 %v320
    %v629 = vunpack.c.l.b16 %v321
    %v630 = vunpack.c.l.b16 %v322
    %v631 = vunpack.c.h.b16 %v322
    %v632 = vunpack.c.l.b16 %v323
    %v633 = vunpack.c.l.b16 %v324
    %v634 = vunpack.c.h.b16 %v324
    %v635 = vunpack.c.l.b16 %v325
    %v636 = vunpack.c.l.b16 %v326
    %v637 = vunpack.c.h.b16 %v326
    %v638 = vunpack.c.l.b16 %v327
    %v639 = vunpack.c.l.b16 %v328
    %v640 = vunpack.c.h.b16 %v328
    %v641 = vunpack.c.l.b16 %v329
    %v642 = vunpack.c.l.b16 %v330
    %v643 = vunpack.c.h.b16 %v330
    %v644 = vunpack.c.l.b16 %v331
    %v645 = vunpack.c.l.b16 %v332
    %v646 = vunpack.c.h.b16 %v332
    %v647 = vunpack.c.l.b16 %v333
    %v648 = vunpack.c.l.b16 %v334
    %v649 = vunpack.c.h.b16 %v334
    %v650 = vunpack.c.l.b16 %v335
    %v651 = vunpack.c.l.b16 %v336
    %v652 = vunpack.c.h.b16 %v336
    %v653 = vunpack.c.l.b16 %v337
    %v654 = vunpack.c.l.b16 %v338
    %v655 = vunpack.c.h.b16 %v338
    %v656 = vunpack.c.l.b16 %v339
    %v657 = vunpack.c.l.b16 %v340
    %v658 = vunpack.c.h.b16 %v340
    %v659 = vunpack.c.l.b16 %v341
    %v660 = vunpack.c.l.b16 %v342
    %v661 = vunpack.c.h.b16 %v342
    %v662 = vunpack.c.l.b16 %v343
    %v663 = vunpack.c.l.b16 %v344
    %v664 = vunpack.c.h.b16 %v344
    %v665 = vunpack.c.l.b16 %v345
    %v666 = vunpack.c.l.b16 %v346
    %v667 = vunpack.c.h.b16 %v346
    %v668 = vunpack.c.l.b16 %v347
    %v669 = vunpack.c.l.b16 %v348
    %v670 = vunpack.c.h.b16 %v348
    %v671 = vunpack.c.l.b16 %v349
    %v672 = vunpack.c.l.b16 %v350
    %v673 = vunpack.c.h.b16 %v350
    %v674 = vunpack.c.l.b16 %v351
    %v675 = vunpack.c.l.b16 %v352
    %v676 = vunpack.c.h.b16 %v352
    %v677 = vunpack.c.l.b16 %v353
    %v678 = vunpack.c.l.b16 %v354
    %v679 = vunpack.c.h.b16 %v354
    %v680 = vunpack.c.l.b16 %v355
    %v681 = vunpack.c.l.b16 %v356
    %v682 = vunpack.c.h.b16 %v356
    %v683 = vunpack.c.l.b16 %v357
    %v684 = vunpack.c.l.b16 %v358
    %v685 = vunpack.c.h.b16 %v358
    %v686 = vunpack.c.l.b16 %v359
    %v687 = vunpack.c.l.b16 %v360
    %v688 = vunpack.c.h.b16 %v360
    %v689 = vunpack.c.l.b16 %v361
    %v690 = vunpack.c.l.b16 %v362
    %v691 = vunpack.c.h.b16 %v362
    %v692 = vunpack.c.l.b16 %v363
    %v693 = vunpack.c.l.b16 %v364
    %v694 = vunpack.c.h.b16 %v364
    %v695 = vunpack.c.l.b16 %v365
    %v696 = vunpack.c.l.b16 %v366
    %v697 = vunpack.c.h.b16 %v366
    %v698 = vunpack.c.l.b16 %v367
    %v699 = vunpack.c.l.b16 %v368
    %v700 = vunpack.c.h.b16 %v368
    %v701 = vunpack.c.l.b16 %v369
    %v702 = vunpack.c.l.b16 %v370
    %v703 = vunpack.c.h.b16 %v370
    %v704 = vunpack.c.l.b16 %v371
    %v705 = vunpack.c.l.b16 %v372
    %v706 = vunpack.c.h.b16 %v372
    %v707 = vunpack.c.l.b16 %v373
    %v708 = vunpack.c.l.b16 %v374
    %v709 = vunpack.c.h.b16 %v374
    %v710 = vunpack.c.l.b16 %v375
    %v711 = vunpack.c.l.b16 %v376
    %v712 = vunpack.c.h.b16 %v376
    %v713 = vunpack.c.l.b16 %v377
    %v714 = vunpack.c.l.b16 %v378
    %v715 = vunpack.c.h.b16 %v378
    %v716 = vunpack.c.l.b16 %v379
    %v717 = vpack.c.b16 %v528, %v525
    %v718 = vpack.c.b16 %v529, %v526
    %v719 = vpack.c.b16 %v530, %v527
    %v720 = vpack.c.b16 %v534, %v531
    %v721 = vpack.c.b16 %v535, %v532
    %v722 = vpack.c.b16 %v536, %v533
    %v723 = vpack.c.b16 %v540, %v537
    %v724 = vpack.c.b16 %v541, %v538
    %v725 = vpack.c.b16 %v542, %v539
    %v726 = vpack.c.b16 %v546, %v543
    %v727 = vpack.c.b16 %v547, %v544
    %v728 = vpack.c.b16 %v548, %v545
    %v729 = vpack.c.b16 %v552, %v549
    %v730 = vpack.c.b16 %v553, %v550
    %v731 = vpack.c.b16 %v554, %v551
    %v732 = vpack.c.b16 %v558, %v555
    %v733 = vpack.c.b16 %v559, %v556
    %v734 = vpack.c.b16 %v560, %v557
    %v735 = vpack.c.b16 %v564, %v561
    %v736 = vpack.c.b16 %v565, %v562
    %v737 = vpack.c.b16 %v566, %v563
    %v738 = vpack.c.b16 %v570, %v567
    %v739 = vpack.c.b16 %v571, %v568
    %v740 = vpack.c.b16 %v572, %v569
    %v741 = vpack.c.b16 %v576, %v573
    %v742 = vpack.c.b16 %v577, %v574
    %v743 = vpack.c.b16 %v578, %v575
    %v744 = vpack.c.b16 %v582, %v579
    %v745 = vpack.c.b16 %v583, %v580
    %v746 = vpack.c.b16 %v584, %v581
    %v747 = vpack.c.b16 %v588, %v585
    %v748 = vpack.c.b16 %v589, %v586
    %v749 = vpack.c.b16 %v590, %v587
    %v750 = vpack.c.b16 %v594, %v591
    %v751 = vpack.c.b16 %v595, %v592
    %v752 = vpack.c.b16 %v596, %v593
    %v753 = vpack.c.b16 %v600, %v597
    %v754 = vpack.c.b16 %v601, %v598
    %v755 = vpack.c.b16 %v602, %v599
    %v756 = vpack.c.b16 %v606, %v603
    %v757 = vpack.c.b16 %v607, %v604
    %v758 = vpack.c.b16 %v608, %v605
    %v759 = vpack.c.b16 %v612, %v609
    %v760 = vpack.c.b16 %v613, %v610
    %v761 = vpack.c.b16 %v614, %v611
    %v762 = vpack.c.b16 %v618, %v615
    %v763 = vpack.c.b16 %v619, %v616
    %v764 = vpack.c.b16 %v620, %v617
    %v765 = vpack.c.b16 %v624, %v621
    %v766 = vpack.c.b16 %v625, %v622
    %v767 = vpack.c.b16 %v626, %v623
    %v768 = vpack.c.b16 %v630, %v627
    %v769 = vpack.c.b16 %v631, %v628
    %v770 = vpack.c.b16 %v632, %v629
    %v771 = vpack.c.b16 %v636, %v633
    %v772 = vpack.c.b16 %v637, %v634
    %v773 = vpack.c.b16 %v638, %v635
    %v774 = vpack.c.b16 %v642, %v639
    %v775 = vpack.c.b16 %v643, %v640
    %v776 = vpack.c.b16 %v644, %v641
    %v777 = vpack.c.b16 %v648, %v645
    %v778 = vpack.c.b16 %v649, %v646
    %v779 = vpack.c.b16 %v650, %v647
    %v780 = vpack.c.b16 %v654, %v651
    %v781 = vpack.c.b16 %v655, %v652
    %v782 = vpack.c.b16 %v656, %v653
    %v783 = vpack.c.b16 %v660, %v657
    %v784 = vpack.c.b16 %v661, %v658
    %v785 = vpack.c.b16 %v662, %v659
    %v786 = vpack.c.b16 %v666, %v663
    %v787 = vpack.c.b16 %v667, %v664
    %v788 = vpack.c.b16 %v668, %v665
    %v789 = vpack.c.b16 %v672, %v669
    %v790 = vpack.c.b16 %v673, %v670
    %v791 = vpack.c.b16 %v674, %v671
    %v792 = vpack.c.b16 %v678, %v675
    %v793 = vpack.c.b16 %v679, %v676
    %v794 = vpack.c.b16 %v680, %v677
    %v795 = vpack.c.b16 %v684, %v681
    %v796 = vpack.c.b16 %v685, %v682
    %v797 = vpack.c.b16 %v686, %v683
    %v798 = vpack.c.b16 %v690, %v687
    %v799 = vpack.c.b16 %v691, %v688
    %v800 = vpack.c.b16 %v692, %v689
    %v801 = vpack.c.b16 %v696, %v693
    %v802 = vpack.c.b16 %v697, %v694
    %v803 = vpack.c.b16 %v698, %v695
    %v804 = vpack.c.b16 %v702, %v699
    %v805 = vpack.c.b16 %v703, %v700
    %v806 = vpack.c.b16 %v704, %v701
    %v807 = vpack.c.b16 %v708, %v705
    %v808 = vpack.c.b16 %v709, %v706
    %v809 = vpack.c.b16 %v710, %v707
    %v810 = vpack.c.b16 %v714, %v711
    %v811 = vpack.c.b16 %v715, %v712
    %v812 = vpack.c.b16 %v716, %v713
    %909 = vmatprep.subr.bf16.mxu0 %v739
    %910 = vmatpush1.bf16.msra.mxu0 %v738
    %911 = vmatprep.subr.bf16.mxu0 %v736
    %912 = vmatpush1.bf16.msra.mxu0 %v735
    %913 = vmatprep.subr.bf16.mxu0 %v733
    %914 = vmatpush1.bf16.msra.mxu0 %v732
    %915 = vmatprep.subr.bf16.mxu0 %v730
    %916 = vmatpush1.bf16.msra.mxu0 %v729
    %917 = vmatprep.subr.bf16.mxu0 %v727
    %918 = vmatpush1.bf16.msra.mxu0 %v726
    %919 = vmatprep.subr.bf16.mxu0 %v724
    %920 = vmatpush1.bf16.msra.mxu0 %v723
    %921 = vmatprep.subr.bf16.mxu0 %v721
    %922 = vmatpush1.bf16.msra.mxu0 %v720
    %923 = vmatprep.subr.bf16.mxu0 %v718
    %924 = vmatpush1.bf16.msra.mxu0 %v717
    %925 = vmatprep.subr.bf16.mxu0 %v763
    %926 = vmatpush2.bf16.msra.mxu0 %v762
    %927 = vmatprep.subr.bf16.mxu0 %v760
    %928 = vmatpush2.bf16.msra.mxu0 %v759
    %929 = vmatprep.subr.bf16.mxu0 %v757
    %930 = vmatpush2.bf16.msra.mxu0 %v756
    %931 = vmatprep.subr.bf16.mxu0 %v754
    %932 = vmatpush2.bf16.msra.mxu0 %v753
    %933 = vmatprep.subr.bf16.mxu0 %v751
    %934 = vmatpush2.bf16.msra.mxu0 %v750
    %935 = vmatprep.subr.bf16.mxu0 %v748
    %936 = vmatpush2.bf16.msra.mxu0 %v747
    %937 = vmatprep.subr.bf16.mxu0 %v745
    %938 = vmatpush2.bf16.msra.mxu0 %v744
    %939 = vmatprep.subr.bf16.mxu0 %v742
    %940 = vmatpush2.bf16.msra.mxu0 %v741
    %941 = vmatprep.mubr.bf16.mxu0 %v249
    %942 = vmatmul.mubr.bf16.gmra.mxu0 %v248
    %v943 = vpop.f32.mrf.mxu0
    %v944 = vadd.f32 %v385, %v943
    %v945 = vpop.f32.mrf.mxu0
    %v946 = vadd.f32 %v389, %v945
    %v947 = vpop.f32.mrf.mxu0
    %v948 = vpop.f32.mrf.mxu0
    %949 = vdwg.mxu0
    %950 = vmatprep.subr.bf16.mxu0 %v787
    %951 = vmatpush1.bf16.msra.mxu0 %v786
    %952 = vmatprep.subr.bf16.mxu0 %v784
    %953 = vmatpush1.bf16.msra.mxu0 %v783
    %954 = vmatprep.subr.bf16.mxu0 %v781
    %955 = vmatpush1.bf16.msra.mxu0 %v780
    %956 = vmatprep.subr.bf16.mxu0 %v778
    %957 = vmatpush1.bf16.msra.mxu0 %v777
    %958 = vmatprep.subr.bf16.mxu0 %v775
    %959 = vmatpush1.bf16.msra.mxu0 %v774
    %960 = vmatprep.subr.bf16.mxu0 %v772
    %961 = vmatpush1.bf16.msra.mxu0 %v771
    %962 = vmatprep.subr.bf16.mxu0 %v769
    %963 = vmatpush1.bf16.msra.mxu0 %v768
    %964 = vmatprep.subr.bf16.mxu0 %v766
    %965 = vmatpush1.bf16.msra.mxu0 %v765
    %966 = vmatprep.subr.bf16.mxu0 %v811
    %967 = vmatpush2.bf16.msra.mxu0 %v810
    %968 = vmatprep.subr.bf16.mxu0 %v808
    %969 = vmatpush2.bf16.msra.mxu0 %v807
    %970 = vmatprep.subr.bf16.mxu0 %v805
    %971 = vmatpush2.bf16.msra.mxu0 %v804
    %972 = vmatprep.subr.bf16.mxu0 %v802
    %973 = vmatpush2.bf16.msra.mxu0 %v801
    %974 = vmatprep.subr.bf16.mxu0 %v799
    %975 = vmatpush2.bf16.msra.mxu0 %v798
    %976 = vmatprep.subr.bf16.mxu0 %v796
    %977 = vmatpush2.bf16.msra.mxu0 %v795
    %978 = vmatprep.subr.bf16.mxu0 %v793
    %979 = vmatpush2.bf16.msra.mxu0 %v792
    %980 = vmatprep.subr.bf16.mxu0 %v790
    %981 = vmatpush2.bf16.msra.mxu0 %v789
    %982 = vmatprep.mubr.bf16.mxu0 %v251
    %983 = vmatmul.mubr.bf16.gmra.mxu0 %v250
    %v984 = vpop.f32.mrf.mxu0
    %v985 = vadd.f32 %v944, %v984
    %v986 = vpop.f32.mrf.mxu0
    %v987 = vadd.f32 %v946, %v986
    %v988 = vpop.f32.mrf.mxu0
    %v989 = vpop.f32.mrf.mxu0
    %990 = vdwg.mxu0
    %991 = vmatprep.subr.bf16.mxu0 0
    %992 = vmatpush1.bf16.msra.mxu0 %v740
    %993 = vmatprep.subr.bf16.mxu0 0
    %994 = vmatpush1.bf16.msra.mxu0 %v737
    %995 = vmatprep.subr.bf16.mxu0 0
    %996 = vmatpush1.bf16.msra.mxu0 %v734
    %997 = vmatprep.subr.bf16.mxu0 0
    %998 = vmatpush1.bf16.msra.mxu0 %v731
    %999 = vmatprep.subr.bf16.mxu0 0
    %1000 = vmatpush1.bf16.msra.mxu0 %v728
    %1001 = vmatprep.subr.bf16.mxu0 0
    %1002 = vmatpush1.bf16.msra.mxu0 %v725
    %1003 = vmatprep.subr.bf16.mxu0 0
    %1004 = vmatpush1.bf16.msra.mxu0 %v722
    %1005 = vmatprep.subr.bf16.mxu0 0
    %1006 = vmatpush1.bf16.msra.mxu0 %v719
    %1007 = vmatprep.subr.bf16.mxu0 0
    %1008 = vmatpush2.bf16.msra.mxu0 %v764
    %1009 = vmatprep.subr.bf16.mxu0 0
    %1010 = vmatpush2.bf16.msra.mxu0 %v761
    %1011 = vmatprep.subr.bf16.mxu0 0
    %1012 = vmatpush2.bf16.msra.mxu0 %v758
    %1013 = vmatprep.subr.bf16.mxu0 0
    %1014 = vmatpush2.bf16.msra.mxu0 %v755
    %1015 = vmatprep.subr.bf16.mxu0 0
    %1016 = vmatpush2.bf16.msra.mxu0 %v752
    %1017 = vmatprep.subr.bf16.mxu0 0
    %1018 = vmatpush2.bf16.msra.mxu0 %v749
    %1019 = vmatprep.subr.bf16.mxu0 0
    %1020 = vmatpush2.bf16.msra.mxu0 %v746
    %1021 = vmatprep.subr.bf16.mxu0 0
    %1022 = vmatpush2.bf16.msra.mxu0 %v743
    %1023 = vmatprep.mubr.bf16.mxu0 %v249
    %1024 = vmatmul.mubr.bf16.gmra.mxu0 %v248
    %v1025 = vpop.f32.mrf.mxu0
    %v1026 = vadd.f32 %v393, %v1025
    %v1027 = vpop.f32.mrf.mxu0
    %v1028 = vpop.f32.mrf.mxu0
    %v1029 = vpop.f32.mrf.mxu0
    %1030 = vdwg.mxu0
    %1031 = vmatprep.subr.bf16.mxu0 0
    %1032 = vmatpush1.bf16.msra.mxu0 %v788
    %1033 = vmatprep.subr.bf16.mxu0 0
    %1034 = vmatpush1.bf16.msra.mxu0 %v785
    %1035 = vmatprep.subr.bf16.mxu0 0
    %1036 = vmatpush1.bf16.msra.mxu0 %v782
    %1037 = vmatprep.subr.bf16.mxu0 0
    %1038 = vmatpush1.bf16.msra.mxu0 %v779
    %1039 = vmatprep.subr.bf16.mxu0 0
    %1040 = vmatpush1.bf16.msra.mxu0 %v776
    %1041 = vmatprep.subr.bf16.mxu0 0
    %1042 = vmatpush1.bf16.msra.mxu0 %v773
    %1043 = vmatprep.subr.bf16.mxu0 0
    %1044 = vmatpush1.bf16.msra.mxu0 %v770
    %1045 = vmatprep.subr.bf16.mxu0 0
    %1046 = vmatpush1.bf16.msra.mxu0 %v767
    %1047 = vmatprep.subr.bf16.mxu0 0
    %1048 = vmatpush2.bf16.msra.mxu0 %v812
    %1049 = vmatprep.subr.bf16.mxu0 0
    %1050 = vmatpush2.bf16.msra.mxu0 %v809
    %1051 = vmatprep.subr.bf16.mxu0 0
    %1052 = vmatpush2.bf16.msra.mxu0 %v806
    %1053 = vmatprep.subr.bf16.mxu0 0
    %1054 = vmatpush2.bf16.msra.mxu0 %v803
    %1055 = vmatprep.subr.bf16.mxu0 0
    %1056 = vmatpush2.bf16.msra.mxu0 %v800
    %1057 = vmatprep.subr.bf16.mxu0 0
    %1058 = vmatpush2.bf16.msra.mxu0 %v797
    %1059 = vmatprep.subr.bf16.mxu0 0
    %1060 = vmatpush2.bf16.msra.mxu0 %v794
    %1061 = vmatprep.subr.bf16.mxu0 0
    %1062 = vmatpush2.bf16.msra.mxu0 %v791
    %1063 = vmatprep.mubr.bf16.mxu0 %v251
    %1064 = vmatmul.mubr.bf16.gmra.mxu0 %v250
    %v1065 = vpop.f32.mrf.mxu0
    %v1066 = vadd.f32 %v1026, %v1065
    %v1067 = vpop.f32.mrf.mxu0
    %v1068 = vpop.f32.mrf.mxu0
    %v1069 = vpop.f32.mrf.mxu0
    %1070 = vdwg.mxu0
    %v1071 = vmax.f32 %v985, 0.0
    %v1072 = vmax.f32 %v987, 0.0
    %v1073 = vmax.f32 %v1066, 0.0
    %v1074 = vpack.c.bf16 %v1071, %v1071
    %v1075 = vpack.c.bf16 %v1072, %v1072
    %v1076 = vpack.c.bf16 %v1073, %v1073
    %v1077 = vld [vmem:[#allocation8] sm:$0xf]
    %v1078 = vld [vmem:[#allocation8 + $0x4] sm:$0xf]
    %v1079 = vld [vmem:[#allocation8 + $0x8] sm:$0xf]
    %v1080 = vld [vmem:[#allocation8 + $0xc] sm:$0xf]
    %v1081 = vld [vmem:[#allocation8 + $0x10] sm:$0xf]
    %v1082 = vld [vmem:[#allocation8 + $0x14] sm:$0xf]
    %v1083 = vld [vmem:[#allocation8 + $0x18] sm:$0xf]
    %v1084 = vld [vmem:[#allocation8 + $0x1c] sm:$0xf]
    %v1085 = vld [vmem:[#allocation8 + $0x20] sm:$0xf]
    %v1086 = vld [vmem:[#allocation8 + $0x24] sm:$0xf]
    %v1087 = vld [vmem:[#allocation8 + $0x28] sm:$0xf]
    %v1088 = vld [vmem:[#allocation8 + $0x2c] sm:$0xf]
    %v1089 = vld [vmem:[#allocation8 + $0x30] sm:$0xf]
    %v1090 = vld [vmem:[#allocation8 + $0x34] sm:$0xf]
    %v1091 = vld [vmem:[#allocation8 + $0x38] sm:$0xf]
    %v1092 = vld [vmem:[#allocation8 + $0x3c] sm:$0xf]
    %v1093 = vld [vmem:[#allocation8 + $0x40] sm:$0xf]
    %v1094 = vld [vmem:[#allocation8 + $0x44] sm:$0xf]
    %v1095 = vld [vmem:[#allocation8 + $0x48] sm:$0xf]
    %v1096 = vld [vmem:[#allocation8 + $0x4c] sm:$0xf]
    %v1097 = vld [vmem:[#allocation8 + $0x50] sm:$0xf]
    %v1098 = vld [vmem:[#allocation8 + $0x54] sm:$0xf]
    %v1099 = vld [vmem:[#allocation8 + $0x58] sm:$0xf]
    %v1100 = vld [vmem:[#allocation8 + $0x5c] sm:$0xf]
    %v1101 = vld [vmem:[#allocation8 + $0x60] sm:$0xf]
    %v1102 = vld [vmem:[#allocation8 + $0x64] sm:$0xf]
    %v1103 = vld [vmem:[#allocation8 + $0x68] sm:$0xf]
    %v1104 = vld [vmem:[#allocation8 + $0x6c] sm:$0xf]
    %v1105 = vld [vmem:[#allocation8 + $0x70] sm:$0xf]
    %v1106 = vld [vmem:[#allocation8 + $0x74] sm:$0xf]
    %v1107 = vld [vmem:[#allocation8 + $0x78] sm:$0xf]
    %v1108 = vld [vmem:[#allocation8 + $0x7c] sm:$0xf]
    %v1109 = vld [vmem:[#allocation8 + $0x80] sm:$0xf]
    %v1110 = vld [vmem:[#allocation8 + $0x84] sm:$0xf]
    %v1111 = vld [vmem:[#allocation8 + $0x88] sm:$0xf]
    %v1112 = vld [vmem:[#allocation8 + $0x8c] sm:$0xf]
    %v1113 = vld [vmem:[#allocation8 + $0x90] sm:$0xf]
    %v1114 = vld [vmem:[#allocation8 + $0x94] sm:$0xf]
    %v1115 = vld [vmem:[#allocation8 + $0x98] sm:$0xf]
    %v1116 = vld [vmem:[#allocation8 + $0x9c] sm:$0xf]
    %v1117 = vld [vmem:[#allocation8 + $0xa0] sm:$0xf]
    %v1118 = vld [vmem:[#allocation8 + $0xa4] sm:$0xf]
    %v1119 = vld [vmem:[#allocation8 + $0xa8] sm:$0xf]
    %v1120 = vld [vmem:[#allocation8 + $0xac] sm:$0xf]
    %v1121 = vld [vmem:[#allocation8 + $0xb0] sm:$0xf]
    %v1122 = vld [vmem:[#allocation8 + $0xb4] sm:$0xf]
    %v1123 = vld [vmem:[#allocation8 + $0xb8] sm:$0xf]
    %v1124 = vld [vmem:[#allocation8 + $0xbc] sm:$0xf]
    %v1125 = vld [vmem:[#allocation10 + $0x7] sm:$0x1]
    %v1127 = vlaneseq
    %v1128 = vshrl.u32 %v1127, 7
    %v1129 = vsub.s32 0, %v1128
    %v1130 = vrot.slane %v1125, %v1129
    %v1180 = vunpack.c.l.b16 %v1077
    %v1181 = vunpack.c.l.b16 %v1078
    %v1182 = vunpack.c.l.b16 %v1079
    %v1183 = vunpack.c.l.b16 %v1080
    %v1184 = vunpack.c.l.b16 %v1081
    %v1185 = vunpack.c.l.b16 %v1082
    %v1186 = vunpack.c.l.b16 %v1083
    %v1187 = vunpack.c.l.b16 %v1084
    %v1188 = vunpack.c.l.b16 %v1085
    %v1189 = vunpack.c.l.b16 %v1086
    %v1190 = vunpack.c.l.b16 %v1087
    %v1191 = vunpack.c.l.b16 %v1088
    %v1192 = vunpack.c.l.b16 %v1089
    %v1193 = vunpack.c.l.b16 %v1090
    %v1194 = vunpack.c.l.b16 %v1091
    %v1195 = vunpack.c.l.b16 %v1092
    %v1196 = vunpack.c.l.b16 %v1093
    %v1197 = vunpack.c.l.b16 %v1094
    %v1198 = vunpack.c.l.b16 %v1095
    %v1199 = vunpack.c.l.b16 %v1096
    %v1200 = vunpack.c.l.b16 %v1097
    %v1201 = vunpack.c.l.b16 %v1098
    %v1202 = vunpack.c.l.b16 %v1099
    %v1203 = vunpack.c.l.b16 %v1100
    %v1204 = vunpack.c.l.b16 %v1101
    %v1205 = vunpack.c.l.b16 %v1102
    %v1206 = vunpack.c.l.b16 %v1103
    %v1207 = vunpack.c.l.b16 %v1104
    %v1208 = vunpack.c.l.b16 %v1105
    %v1209 = vunpack.c.l.b16 %v1106
    %v1210 = vunpack.c.l.b16 %v1107
    %v1211 = vunpack.c.l.b16 %v1108
    %v1212 = vunpack.c.l.b16 %v1109
    %v1213 = vunpack.c.l.b16 %v1110
    %v1214 = vunpack.c.l.b16 %v1111
    %v1215 = vunpack.c.l.b16 %v1112
    %v1216 = vunpack.c.l.b16 %v1113
    %v1217 = vunpack.c.l.b16 %v1114
    %v1218 = vunpack.c.l.b16 %v1115
    %v1219 = vunpack.c.l.b16 %v1116
    %v1220 = vunpack.c.l.b16 %v1117
    %v1221 = vunpack.c.l.b16 %v1118
    %v1222 = vunpack.c.l.b16 %v1119
    %v1223 = vunpack.c.l.b16 %v1120
    %v1224 = vunpack.c.l.b16 %v1121
    %v1225 = vunpack.c.l.b16 %v1122
    %v1226 = vunpack.c.l.b16 %v1123
    %v1227 = vunpack.c.l.b16 %v1124
    %v1228 = vpack.c.b16 %v1181, %v1180
    %v1229 = vpack.c.b16 %v1183, %v1182
    %v1230 = vpack.c.b16 %v1185, %v1184
    %v1231 = vpack.c.b16 %v1187, %v1186
    %v1232 = vpack.c.b16 %v1189, %v1188
    %v1233 = vpack.c.b16 %v1191, %v1190
    %v1234 = vpack.c.b16 %v1193, %v1192
    %v1235 = vpack.c.b16 %v1195, %v1194
    %v1236 = vpack.c.b16 %v1197, %v1196
    %v1237 = vpack.c.b16 %v1199, %v1198
    %v1238 = vpack.c.b16 %v1201, %v1200
    %v1239 = vpack.c.b16 %v1203, %v1202
    %v1240 = vpack.c.b16 %v1205, %v1204
    %v1241 = vpack.c.b16 %v1207, %v1206
    %v1242 = vpack.c.b16 %v1209, %v1208
    %v1243 = vpack.c.b16 %v1211, %v1210
    %v1244 = vpack.c.b16 %v1213, %v1212
    %v1245 = vpack.c.b16 %v1215, %v1214
    %v1246 = vpack.c.b16 %v1217, %v1216
    %v1247 = vpack.c.b16 %v1219, %v1218
    %v1248 = vpack.c.b16 %v1221, %v1220
    %v1249 = vpack.c.b16 %v1223, %v1222
    %v1250 = vpack.c.b16 %v1225, %v1224
    %v1251 = vpack.c.b16 %v1227, %v1226
    %1276 = vmatprep.subr.bf16.mxu0 0
    %1277 = vmatpush1.bf16.msra.mxu0 %v1235
    %1278 = vmatprep.subr.bf16.mxu0 0
    %1279 = vmatpush1.bf16.msra.mxu0 %v1234
    %1280 = vmatprep.subr.bf16.mxu0 0
    %1281 = vmatpush1.bf16.msra.mxu0 %v1233
    %1282 = vmatprep.subr.bf16.mxu0 0
    %1283 = vmatpush1.bf16.msra.mxu0 %v1232
    %1284 = vmatprep.subr.bf16.mxu0 0
    %1285 = vmatpush1.bf16.msra.mxu0 %v1231
    %1286 = vmatprep.subr.bf16.mxu0 0
    %1287 = vmatpush1.bf16.msra.mxu0 %v1230
    %1288 = vmatprep.subr.bf16.mxu0 0
    %1289 = vmatpush1.bf16.msra.mxu0 %v1229
    %1290 = vmatprep.subr.bf16.mxu0 0
    %1291 = vmatpush1.bf16.msra.mxu0 %v1228
    %1292 = vmatprep.subr.bf16.mxu0 0
    %1293 = vmatpush2.bf16.msra.mxu0 %v1243
    %1294 = vmatprep.subr.bf16.mxu0 0
    %1295 = vmatpush2.bf16.msra.mxu0 %v1242
    %1296 = vmatprep.subr.bf16.mxu0 0
    %1297 = vmatpush2.bf16.msra.mxu0 %v1241
    %1298 = vmatprep.subr.bf16.mxu0 0
    %1299 = vmatpush2.bf16.msra.mxu0 %v1240
    %1300 = vmatprep.subr.bf16.mxu0 0
    %1301 = vmatpush2.bf16.msra.mxu0 %v1239
    %1302 = vmatprep.subr.bf16.mxu0 0
    %1303 = vmatpush2.bf16.msra.mxu0 %v1238
    %1304 = vmatprep.subr.bf16.mxu0 0
    %1305 = vmatpush2.bf16.msra.mxu0 %v1237
    %1306 = vmatprep.subr.bf16.mxu0 0
    %1307 = vmatpush2.bf16.msra.mxu0 %v1236
    %1308 = vmatprep.mubr.bf16.mxu0 %v1075
    %1309 = vmatmul.mubr.bf16.gmra.mxu0 %v1074
    %v1310 = vpop.f32.mrf.mxu0
    %v1311 = vadd.f32 %v1130, %v1310
    %v1312 = vpop.f32.mrf.mxu0
    %v1313 = vpop.f32.mrf.mxu0
    %v1314 = vpop.f32.mrf.mxu0
    %1315 = vdwg.mxu0
    %1316 = vmatprep.subr.bf16.mxu0 0
    %1317 = vmatpush1.bf16.msra.mxu0 %v1251
    %1318 = vmatprep.subr.bf16.mxu0 0
    %1319 = vmatpush1.bf16.msra.mxu0 %v1250
    %1320 = vmatprep.subr.bf16.mxu0 0
    %1321 = vmatpush1.bf16.msra.mxu0 %v1249
    %1322 = vmatprep.subr.bf16.mxu0 0
    %1323 = vmatpush1.bf16.msra.mxu0 %v1248
    %1324 = vmatprep.subr.bf16.mxu0 0
    %1325 = vmatpush1.bf16.msra.mxu0 %v1247
    %1326 = vmatprep.subr.bf16.mxu0 0
    %1327 = vmatpush1.bf16.msra.mxu0 %v1246
    %1328 = vmatprep.subr.bf16.mxu0 0
    %1329 = vmatpush1.bf16.msra.mxu0 %v1245
    %1330 = vmatprep.subr.bf16.mxu0 0
    %1331 = vmatpush1.bf16.msra.mxu0 %v1244
    %1332 = vmatprep.subr.bf16.mxu0 0
    %1333 = vmatpush2.bf16.msra.mxu0 0
    %1334 = vmatprep.subr.bf16.mxu0 0
    %1335 = vmatpush2.bf16.msra.mxu0 0
    %1336 = vmatprep.subr.bf16.mxu0 0
    %1337 = vmatpush2.bf16.msra.mxu0 0
    %1338 = vmatprep.subr.bf16.mxu0 0
    %1339 = vmatpush2.bf16.msra.mxu0 0
    %1340 = vmatprep.subr.bf16.mxu0 0
    %1341 = vmatpush2.bf16.msra.mxu0 0
    %1342 = vmatprep.subr.bf16.mxu0 0
    %1343 = vmatpush2.bf16.msra.mxu0 0
    %1344 = vmatprep.subr.bf16.mxu0 0
    %1345 = vmatpush2.bf16.msra.mxu0 0
    %1346 = vmatprep.subr.bf16.mxu0 0
    %1347 = vmatpush2.bf16.msra.mxu0 0
    %1348 = vmatprep.mubr.bf16.mxu0 0
    %1349 = vmatmul.mubr.bf16.gmra.mxu0 %v1076
    %v1350 = vpop.f32.mrf.mxu0
    %v1351 = vadd.f32 %v1311, %v1350
    %v1352 = vpop.f32.mrf.mxu0
    %v1353 = vpop.f32.mrf.mxu0
    %v1354 = vpop.f32.mrf.mxu0
    %1355 = vdwg.mxu0
    %v1356 = vsub.f32 0.0, %v1351
    %v1357 = vmul.f32 %v1356, 1.442695
    %v1358 = vpow.pop %v1357
    %v1359 = vadd.f32 %v1358, 1.0
    %v1360 = vrcp.pop %v1359
    %v1361 = vmul.f32 1.0, %v1360
    %v1362 = vmul.f32 %v1361, 2.0
    %v1363 = vadd.f32 %v1362, -1.0
    %1364 = vst [vmem:[#allocation11] sm:$0xff] %v1363
    // Predicated region
    $region42: #{tpu_custom_call.1} parent=1 // pred_check
      _
    $region43: #{tpu_custom_call.1} parent=1 // pred_check_branch
      %1366 = sbr.rel (0) target = $region45
    $region44: #{tpu_custom_call.1} parent=1 // pred_region
      %s1368 = ssub.s32 128, 128
      %1369 = vsyncadd [#allocation4], %s1368
      %s1371 = sshll.u32 [#allocation11], 4
      %s1372 = int_to_ptr.vmem [resolvable:$true] %s1371
      %1374 = dma.vmem_to_hbm [thread:$0]  %s1372, 128, %s5, [#allocation4]
    $region45: #{tpu_custom_call.1} parent=1 // pred_fallthru
      _
    // Predicated region
    $region46: #{tpu_custom_call.1} parent=1 // pred_check
      _
    $region47: #{tpu_custom_call.1} parent=1 // pred_check_branch
      %1376 = sbr.rel (0) target = $region49
    $region48: #{tpu_custom_call.1} parent=1 // pred_region
      %1377 = dma.done [#allocation4], 128
    $region49: #{tpu_custom_call.1} parent=1 // pred_fallthru
      _
    %1378 = vsyncpa [#allocation3], 1
    %1379 = vsyncpa [#allocation6], 1
    %1380 = vsyncpa [#allocation9], 1
    %1381 = vsyncpa [#allocation4], 1

</llo_original>
